<compile_context>
chip_gen: v6e
topology: v6e:2x2x1
jax: 0.10.0
libtpu: 0.0.40
codegen_flags: <defaults>
</compile_context>

<pallas_src>
import math

import jax
import jax.numpy as jnp
from jax.experimental import pallas as pl
from jax.experimental.pallas import tpu as pltpu

_LANE = 128
_SUBLANE = 8


def _round_up(x, m):
    return ((x + m - 1) // m) * m


def _choose_lane_tile(dim, max_tile=1024, waste_frac=0.125):
    """Lane-dim (last-dim) tile: multiple of 128, padding-aware."""
    need = _round_up(dim, _LANE)
    if need <= max_tile:
        return need                      # single full-width block, minimal pad
    chosen = _LANE                       # 128 is always the minimum-waste tile
    for t in (128, 256, 512, 1024):
        if t > max_tile:
            break
        if _round_up(dim, t) - need <= waste_frac * need:
            chosen = t                   # prefer the largest acceptable tile
    return chosen


def _choose_sublane_tile(dim, max_tile=512, waste_frac=0.125):
    """Sublane-dim (second-last) tile: multiple of 8, padding-aware."""
    need = _round_up(dim, _SUBLANE)
    if need <= max_tile:
        return need
    chosen = 128
    for t in (128, 256, 512):
        if t > max_tile:
            break
        if _round_up(dim, t) - need <= waste_frac * need:
            chosen = t
    return chosen


def _ensure_two_blocks(dim, tile):
    """Shrink a lane tile so the padded dim has >=2 blocks (keeps both v7x
    TensorCores busy when the M grid collapses to 1), minimizing extra pad."""
    if dim <= _LANE or _round_up(dim, tile) // tile >= 2:
        return tile
    best_key, best_t = None, tile
    for t in range(_LANE, tile, _LANE):
        pad = _round_up(dim, t)
        if pad // t < 2:
            continue
        key = (pad, -t)
        if best_key is None or key < best_key:
            best_key, best_t = key, t
    return best_t


def _bandit_linear_kernel(x_ref, w_ref, b_ref, o_ref, acc_ref):
    # x_ref: (tm, tk)  w_ref: (tk, tn)  b_ref: (1, tn)  o_ref/acc_ref: (tm, tn)
    k = pl.program_id(2)
    partial = jnp.dot(x_ref[...], w_ref[...], preferred_element_type=jnp.float32)

    @pl.when(k == 0)
    def _():
        acc_ref[...] = partial           # write-first-step: no zero-init / RMW

    @pl.when(k > 0)
    def _():
        acc_ref[...] += partial

    @pl.when(k == pl.num_programs(2) - 1)
    def _():
        o_ref[...] = (acc_ref[...] + b_ref[...]).astype(o_ref.dtype)


def prepare_bandit_layer(weight, bias):
    """One-time preprocessing of the static parameters.

    * weight is transposed to (in_dim, out_dim) so the kernel runs the
      standard (tm,tk)@(tk,tn) MXU contraction with no in-kernel transpose,
    * weight / bias are padded to tile multiples once, not per forward call.
    """
    out_dim, in_dim = weight.shape
    tk = _choose_lane_tile(in_dim, max_tile=1024)
    tn = _ensure_two_blocks(out_dim, _choose_lane_tile(out_dim, max_tile=512))
    K = _round_up(in_dim, tk)
    N = _round_up(out_dim, tn)
    w_t = jnp.transpose(weight)
    if (K, N) != w_t.shape:
        w_t = jnp.pad(w_t, ((0, K - in_dim), (0, N - out_dim)))
    b2d = (bias if N == out_dim else jnp.pad(bias, (0, N - out_dim))).reshape(1, N)
    return dict(w_t=w_t, b2d=b2d, weight=weight, bias=bias,
                in_dim=in_dim, out_dim=out_dim, tn=tn, tk=tk, N=N, K=K)


def bandit_layer_forward(params, x, *, force_pallas=False):
    """Eval-mode BanditLayer forward: x @ weight.T + bias (tiled M/N/K matmul)."""
    B, in_dim = x.shape
    assert in_dim == params["in_dim"]
    out_dim = params["out_dim"]

    # Tiny GEMVs: pad + pallas_call fixed overhead dominates -- let XLA do it.
    if not force_pallas and 2 * B * in_dim * out_dim < (1 << 22):
        return x @ params["weight"].T + params["bias"]

    tn, tk, N, K = params["tn"], params["tk"], params["N"], params["K"]
    tm = _choose_sublane_tile(B, max_tile=512)
    M = _round_up(B, tm)

    # Only the activation is padded per call (zero K-padding contributes
    # nothing; padded M rows / N cols are sliced off after the call).
    x_p = x if (M == B and K == in_dim) else jnp.pad(x, ((0, M - B), (0, K - in_dim)))

    grid = (M // tm, N // tn, K // tk)
    elt = jnp.dtype(x.dtype).itemsize

    # Bytes accounting includes re-streaming: x is re-read once per N block,
    # W once per M block.
    cost = pl.CostEstimate(
        flops=2 * M * N * K,
        transcendentals=0,
        bytes_accessed=(M * K * (N // tn) + K * N * (M // tm) + N + M * N) * elt,
    )

    # Steady-state VMEM: double-buffered x/W/bias/out tiles + f32 accumulator.
    vmem_need = (2 * (tm * tk + tk * tn + tn) * elt
                 + 2 * tm * tn * elt + tm * tn * 4)
    vmem_limit = int(min(max(2 * vmem_need, 32 << 20), 48 << 20))  # v7x-safe cap

    out = pl.pallas_call(
        _bandit_linear_kernel,
        out_shape=jax.ShapeDtypeStruct((M, N), x.dtype),
        grid_spec=pltpu.PrefetchScalarGridSpec(
            num_scalar_prefetch=0,
            grid=grid,
            in_specs=[
                pl.BlockSpec((tm, tk), lambda i, j, k: (i, k)),   # x tile
                pl.BlockSpec((tk, tn), lambda i, j, k: (k, j)),   # W^T tile
                pl.BlockSpec((1, tn), lambda i, j, k: (0, j)),    # bias tile
            ],
            out_specs=pl.BlockSpec((tm, tn), lambda i, j, k: (i, j)),
            scratch_shapes=[pltpu.VMEM((tm, tn), jnp.float32)],
        ),
        compiler_params=pltpu.CompilerParams(
            dimension_semantics=("parallel", "parallel", "arbitrary"),
            vmem_limit_bytes=vmem_limit,
        ),
        cost_estimate=cost,
    )(x_p, params["w_t"], params["b2d"])

    if M == B and N == out_dim:
        return out
    return out[:B, :out_dim]


def init_bandit_layer_params(key, input_dim, output_dim, dtype=jnp.float32):
    """Deterministic re-implementation of BanditLayer.reset_parameters()."""
    kw, kb = jax.random.split(key)
    fan_in = input_dim
    # kaiming_uniform_(a=sqrt(5)) => bound = sqrt(6/((1+a^2)*fan_in)) = 1/sqrt(fan_in)
    bound = 1.0 / math.sqrt(fan_in)
    weight = jax.random.uniform(
        kw, (output_dim, input_dim), dtype=dtype, minval=-bound, maxval=bound
    )
    bias = jax.random.uniform(
        kb, (output_dim,), dtype=dtype, minval=-bound, maxval=bound
    )
    return weight, bias


# TODO(synk): training-mode path (BoundedME bandit active-set selection with
# per-row data-dependent sparse writes) is undefined in the reference module
# and has no clean Pallas equivalent; only the eval-mode dense forward is
# implemented. bf16 input/weight casting (mem-bound win) is left off by
# default pending a numerics sign-off.


if __name__ == "__main__":
    key = jax.random.PRNGKey(0)

    # --- test 1: the module's nominal small shape, forced through the kernel.
    batch, input_dim, output_dim = 8, 32, 64
    k_x, k_p, k_x2, k_p2 = jax.random.split(key, 4)
    x = jax.random.normal(k_x, (batch, input_dim), dtype=jnp.float32)
    weight, bias = init_bandit_layer_params(k_p, input_dim, output_dim)
    params = prepare_bandit_layer(weight, bias)
    y = jax.block_until_ready(bandit_layer_forward(params, x, force_pallas=True))
    y_ref = x @ weight.T + bias
    assert y.shape == (batch, output_dim)
    assert jnp.allclose(y, y_ref, atol=1e-5, rtol=1e-5)

    # --- test 2: a shape that exercises a real multi-block grid + padding.
    batch2, in2, out2 = 24, 384, 320
    x2 = jax.random.normal(k_x2, (batch2, in2), dtype=jnp.float32)
    w2, b2 = init_bandit_layer_params(k_p2, in2, out2)
    params2 = prepare_bandit_layer(w2, b2)
    y2 = jax.block_until_ready(bandit_layer_forward(params2, x2, force_pallas=True))
    y2_ref = x2 @ w2.T + b2
    assert y2.shape == (batch2, out2)
    assert jnp.allclose(y2, y2_ref, atol=1e-4, rtol=1e-5)

    print("KERNEL_OK")
</pallas_src>

<mosaic_0001>
module attributes {stable_mosaic.version = 11 : i64} {
  func.func @_bandit_linear_kernel(%arg0: i32, %arg1: i32, %arg2: i32, %arg3: memref<8x128xf32, #tpu.memory_space<vmem>>, %arg4: memref<128x128xf32, #tpu.memory_space<vmem>>, %arg5: memref<1x128xf32, #tpu.memory_space<vmem>>, %arg6: memref<8x128xf32, #tpu.memory_space<vmem>>, %arg7: memref<8x128xf32, #tpu.memory_space<vmem>>) attributes {dimension_semantics = [#tpu.dimension_semantics<parallel>, #tpu.dimension_semantics<parallel>, #tpu.dimension_semantics<arbitrary>], iteration_bounds = array<i64: 1, 1, 1>, scalar_prefetch = 0 : i64, scratch_operands = 1 : i64, tpu.core_type = #tpu.core_type<tc>, window_params = [{transform_indices = @transform_0, window_bounds = array<i64: 8, 128>}, {transform_indices = @transform_1, window_bounds = array<i64: 128, 128>}, {transform_indices = @transform_2, window_bounds = array<i64: 1, 128>}, {transform_indices = @transform_3, window_bounds = array<i64: 8, 128>}]} {
    %c0 = arith.constant 0 : index
    %c0_0 = arith.constant 0 : index
    %0 = vector.load %arg3[%c0, %c0_0] : memref<8x128xf32, #tpu.memory_space<vmem>>, vector<8x128xf32>
    %c0_1 = arith.constant 0 : index
    %c0_2 = arith.constant 0 : index
    %1 = vector.load %arg4[%c0_1, %c0_2] : memref<128x128xf32, #tpu.memory_space<vmem>>, vector<128x128xf32>
    %cst = arith.constant dense<0.000000e+00> : vector<8x128xf32>
    %2 = tpu.matmul %0, %1, %cst {dimension_numbers = #tpu.dot_dimension_numbers<[1], [0], [0], [1], [0, 0, 1, 1], [], []>} : vector<8x128xf32>, vector<128x128xf32>, vector<8x128xf32> -> vector<8x128xf32>
    %c0_i32 = arith.constant 0 : i32
    %3 = arith.cmpi eq, %arg2, %c0_i32 : i32
    %4 = arith.extui %3 : i1 to i32
    %c0_i32_3 = arith.constant 0 : i32
    %5 = arith.cmpi ne, %4, %c0_i32_3 : i32
    scf.if %5 {
      %c0_8 = arith.constant 0 : index
      %c0_9 = arith.constant 0 : index
      %12 = vector.load %arg7[%c0_8, %c0_9] : memref<8x128xf32, #tpu.memory_space<vmem>>, vector<8x128xf32>
      tpu.vector_store %arg7[%c0_8, %c0_9], %2 {strides = array<i32>} : memref<8x128xf32, #tpu.memory_space<vmem>>, vector<8x128xf32>,
    } else {
    }
    %c0_i32_4 = arith.constant 0 : i32
    %6 = arith.cmpi sgt, %arg2, %c0_i32_4 : i32
    %7 = arith.extui %6 : i1 to i32
    %c0_i32_5 = arith.constant 0 : i32
    %8 = arith.cmpi ne, %7, %c0_i32_5 : i32
    scf.if %8 {
      %c0_8 = arith.constant 0 : index
      %c0_9 = arith.constant 0 : index
      %12 = vector.load %arg7[%c0_8, %c0_9] : memref<8x128xf32, #tpu.memory_space<vmem>>, vector<8x128xf32>
      %13 = arith.addf %12, %2 : vector<8x128xf32>
      %c0_10 = arith.constant 0 : index
      %c0_11 = arith.constant 0 : index
      %14 = vector.load %arg7[%c0_10, %c0_11] : memref<8x128xf32, #tpu.memory_space<vmem>>, vector<8x128xf32>
      tpu.vector_store %arg7[%c0_10, %c0_11], %13 {strides = array<i32>} : memref<8x128xf32, #tpu.memory_space<vmem>>, vector<8x128xf32>,
    } else {
    }
    %c0_i32_6 = arith.constant 0 : i32
    %9 = arith.cmpi eq, %arg2, %c0_i32_6 : i32
    %10 = arith.extui %9 : i1 to i32
    %c0_i32_7 = arith.constant 0 : i32
    %11 = arith.cmpi ne, %10, %c0_i32_7 : i32
    scf.if %11 {
      %c0_8 = arith.constant 0 : index
      %c0_9 = arith.constant 0 : index
      %12 = vector.load %arg7[%c0_8, %c0_9] : memref<8x128xf32, #tpu.memory_space<vmem>>, vector<8x128xf32>
      %c0_10 = arith.constant 0 : index
      %c0_11 = arith.constant 0 : index
      %13 = vector.load %arg5[%c0_10, %c0_11] : memref<1x128xf32, #tpu.memory_space<vmem>>, vector<1x128xf32>
      %14 = vector.broadcast %13 : vector<1x128xf32> to vector<8x128xf32>
      %15 = arith.addf %12, %14 : vector<8x128xf32>
      %c0_12 = arith.constant 0 : index
      %c0_13 = arith.constant 0 : index
      %16 = vector.load %arg6[%c0_12, %c0_13] : memref<8x128xf32, #tpu.memory_space<vmem>>, vector<8x128xf32>
      tpu.vector_store %arg6[%c0_12, %c0_13], %15 {strides = array<i32>} : memref<8x128xf32, #tpu.memory_space<vmem>>, vector<8x128xf32>,
    } else {
    }
    return
  }
  func.func @transform_0(%arg0: i32, %arg1: i32, %arg2: i32) -> (i32, i32) {
    %c0_i32 = arith.constant 0 : i32
    return %arg0, %arg2 : i32, i32
  }
  func.func @transform_1(%arg0: i32, %arg1: i32, %arg2: i32) -> (i32, i32) {
    %c0_i32 = arith.constant 0 : i32
    return %arg2, %arg1 : i32, i32
  }
  func.func @transform_2(%arg0: i32, %arg1: i32, %arg2: i32) -> (i32, i32) {
    %c0_i32 = arith.constant 0 : i32
    %c0_i32_0 = arith.constant 0 : i32
    return %c0_i32, %arg1 : i32, i32
  }
  func.func @transform_3(%arg0: i32, %arg1: i32, %arg2: i32) -> (i32, i32) {
    %c0_i32 = arith.constant 0 : i32
    return %arg0, %arg1 : i32, i32
  }
}

</mosaic_0001>

<llo_original>
// kernel: tpu_custom_call.1
$region0: #{tpu_custom_call.1}
  #allocation0 [shape = 'u32[]', space=smem, size = 0x4, offset = 0x4, fixed_abs, tag = 'smem constant byte address 0x4 - core index']
  #allocation1 [shape = 'u32[144,128]{1,0:T(1,128)}', space=vmem, size = 0x12000, scoped, tag = 'internal scratch']
  #allocation2 [shape = 'f32[8,128]{1,0:T(8,128)}', space=vmem, size = 0x1000, scoped, tag = 'scratch operand']
  %s0 = inlined_call_operand.hbm [shape: f32[8,128], index: 0, kind: input, shape index: {}]
  %s1 = inlined_call_operand.hbm [shape: f32[128,128], index: 1, kind: input, shape index: {}]
  %s2 = inlined_call_operand.vmem [shape: f32[1,128], index: 2, kind: input, shape index: {}]
  %s3 = inlined_call_operand.hbm [shape: f32[8,128], index: 3, kind: output, shape index: {}]
  %s4 = sld [smem:[#allocation0]]
  $region42: #{tpu_custom_call.1} parent=0
    _
  %s6 = ssub.s32 1, %s4
  %s7 = scalar_select 0, %s6, %s4
  $region1: #{tpu_custom_call.1} parent=0
    #allocation3 [shape = 'u8[4096]{0}', space=vmem, size = 0x1000, scoped, tag = 'input window, operand 0, single buffered']
    #allocation4 [shape = 's32[1]{0}', space=sflag, size = 0x4, scoped, tag = 'scoped memory for tpu_custom_call.1']
    #allocation5 [shape = 's32[1]{0}', space=sflag, size = 0x4, scoped, tag = 'scoped memory for tpu_custom_call.1']
    #allocation6 [shape = 'u8[65536]{0}', space=vmem, size = 0x10000, scoped, tag = 'input window, operand 1, single buffered']
    #allocation7 [shape = 's32[1]{0}', space=sflag, size = 0x4, scoped, tag = 'scoped memory for tpu_custom_call.1']
    #allocation8 [shape = 'u8[4096]{0}', space=vmem, size = 0x1000, scoped, tag = 'output window, operand 0, single buffered']
    %8 = vsyncpa [#allocation4], 0
    %9 = vsyncpa [#allocation7], 0
    %10 = vsyncpa [#allocation5], 0
    // Predicated region
    $region2: #{tpu_custom_call.1} parent=1 // pred_check
      _
    $region3: #{tpu_custom_call.1} parent=1 // pred_check_branch
      %12 = sbr.rel (0) target = $region5
    $region4: #{tpu_custom_call.1} parent=1 // pred_region
      %s14 = ssub.s32 128, 128
      %15 = vsyncadd [#allocation4], %s14
      %s17 = sshll.u32 [#allocation3], 4
      %s18 = int_to_ptr.vmem [resolvable:$true] %s17
      %20 = dma.hbm_to_vmem [thread:$0]  %s0, 128, %s18, [#allocation4]
    $region5: #{tpu_custom_call.1} parent=1 // pred_fallthru
      _
    // Predicated region
    $region6: #{tpu_custom_call.1} parent=1 // pred_check
      _
    $region7: #{tpu_custom_call.1} parent=1 // pred_check_branch
      %22 = sbr.rel (0) target = $region9
    $region8: #{tpu_custom_call.1} parent=1 // pred_region
      %s24 = ssub.s32 2048, 2048
      %25 = vsyncadd [#allocation7], %s24
      %s26 = sshll.u32 [#allocation6], 4
      %s27 = int_to_ptr.vmem [resolvable:$true] %s26
      %32 = dma.hbm_to_vmem [thread:$0]  %s1, 2048, %s27, [#allocation7], 128, 128, 8
    $region9: #{tpu_custom_call.1} parent=1 // pred_fallthru
      _
    // Predicated region
    $region10: #{tpu_custom_call.1} parent=1 // pred_check
      _
    $region11: #{tpu_custom_call.1} parent=1 // pred_check_branch
      %34 = sbr.rel (0) target = $region13
    $region12: #{tpu_custom_call.1} parent=1 // pred_region
      _
    $region13: #{tpu_custom_call.1} parent=1 // pred_fallthru
      _
    // Predicated region
    $region14: #{tpu_custom_call.1} parent=1 // pred_check
      _
    $region15: #{tpu_custom_call.1} parent=1 // pred_check_branch
      %36 = sbr.rel (0) target = $region17
    $region16: #{tpu_custom_call.1} parent=1 // pred_region
      %37 = dma.done [#allocation4], 128
    $region17: #{tpu_custom_call.1} parent=1 // pred_fallthru
      _
    // Predicated region
    $region18: #{tpu_custom_call.1} parent=1 // pred_check
      _
    $region19: #{tpu_custom_call.1} parent=1 // pred_check_branch
      %39 = sbr.rel (0) target = $region21
    $region20: #{tpu_custom_call.1} parent=1 // pred_region
      %40 = dma.done [#allocation7], 2048
    $region21: #{tpu_custom_call.1} parent=1 // pred_fallthru
      _
    %v41 = vld [vmem:[#allocation3] sm:$0xff]
    %v42 = vld [vmem:[#allocation6] sm:$0xff]
    %v43 = vld [vmem:[#allocation6 + $0x8] sm:$0xff]
    %v44 = vld [vmem:[#allocation6 + $0x10] sm:$0xff]
    %v45 = vld [vmem:[#allocation6 + $0x18] sm:$0xff]
    %v46 = vld [vmem:[#allocation6 + $0x20] sm:$0xff]
    %v47 = vld [vmem:[#allocation6 + $0x28] sm:$0xff]
    %v48 = vld [vmem:[#allocation6 + $0x30] sm:$0xff]
    %v49 = vld [vmem:[#allocation6 + $0x38] sm:$0xff]
    %v50 = vld [vmem:[#allocation6 + $0x40] sm:$0xff]
    %v51 = vld [vmem:[#allocation6 + $0x48] sm:$0xff]
    %v52 = vld [vmem:[#allocation6 + $0x50] sm:$0xff]
    %v53 = vld [vmem:[#allocation6 + $0x58] sm:$0xff]
    %v54 = vld [vmem:[#allocation6 + $0x60] sm:$0xff]
    %v55 = vld [vmem:[#allocation6 + $0x68] sm:$0xff]
    %v56 = vld [vmem:[#allocation6 + $0x70] sm:$0xff]
    %v57 = vld [vmem:[#allocation6 + $0x78] sm:$0xff]
    %58 = vmatprep.subr.mxu0 0.0
    %59 = vmatpush1.msra.mxu0 %v57
    %60 = vmatprep.subr.mxu0 0.0
    %61 = vmatpush1.msra.mxu0 %v56
    %62 = vmatprep.subr.mxu0 0.0
    %63 = vmatpush1.msra.mxu0 %v55
    %64 = vmatprep.subr.mxu0 0.0
    %65 = vmatpush1.msra.mxu0 %v54
    %66 = vmatprep.subr.mxu0 0.0
    %67 = vmatpush1.msra.mxu0 %v53
    %68 = vmatprep.subr.mxu0 0.0
    %69 = vmatpush1.msra.mxu0 %v52
    %70 = vmatprep.subr.mxu0 0.0
    %71 = vmatpush1.msra.mxu0 %v51
    %72 = vmatprep.subr.mxu0 0.0
    %73 = vmatpush1.msra.mxu0 %v50
    %74 = vmatprep.subr.mxu0 0.0
    %75 = vmatpush1.msra.mxu0 %v49
    %76 = vmatprep.subr.mxu0 0.0
    %77 = vmatpush1.msra.mxu0 %v48
    %78 = vmatprep.subr.mxu0 0.0
    %79 = vmatpush1.msra.mxu0 %v47
    %80 = vmatprep.subr.mxu0 0.0
    %81 = vmatpush1.msra.mxu0 %v46
    %82 = vmatprep.subr.mxu0 0.0
    %83 = vmatpush1.msra.mxu0 %v45
    %84 = vmatprep.subr.mxu0 0.0
    %85 = vmatpush1.msra.mxu0 %v44
    %86 = vmatprep.subr.mxu0 0.0
    %87 = vmatpush1.msra.mxu0 %v43
    %88 = vmatprep.subr.mxu0 0.0
    %89 = vmatpush1.msra.mxu0 %v42
    %90 = vmatprep.subr.mxu0 0.0
    %91 = vmatpush2.msra.mxu0 0.0
    %92 = vmatprep.subr.mxu0 0.0
    %93 = vmatpush2.msra.mxu0 0.0
    %94 = vmatprep.subr.mxu0 0.0
    %95 = vmatpush2.msra.mxu0 0.0
    %96 = vmatprep.subr.mxu0 0.0
    %97 = vmatpush2.msra.mxu0 0.0
    %98 = vmatprep.subr.mxu0 0.0
    %99 = vmatpush2.msra.mxu0 0.0
    %100 = vmatprep.subr.mxu0 0.0
    %101 = vmatpush2.msra.mxu0 0.0
    %102 = vmatprep.subr.mxu0 0.0
    %103 = vmatpush2.msra.mxu0 0.0
    %104 = vmatprep.subr.mxu0 0.0
    %105 = vmatpush2.msra.mxu0 0.0
    %106 = vmatprep.subr.mxu0 0.0
    %107 = vmatpush2.msra.mxu0 0.0
    %108 = vmatprep.subr.mxu0 0.0
    %109 = vmatpush2.msra.mxu0 0.0
    %110 = vmatprep.subr.mxu0 0.0
    %111 = vmatpush2.msra.mxu0 0.0
    %112 = vmatprep.subr.mxu0 0.0
    %113 = vmatpush2.msra.mxu0 0.0
    %114 = vmatprep.subr.mxu0 0.0
    %115 = vmatpush2.msra.mxu0 0.0
    %116 = vmatprep.subr.mxu0 0.0
    %117 = vmatpush2.msra.mxu0 0.0
    %118 = vmatprep.subr.mxu0 0.0
    %119 = vmatpush2.msra.mxu0 0.0
    %120 = vmatprep.subr.mxu0 0.0
    %121 = vmatpush2.msra.mxu0 0.0
    %122 = vmatprep.mubr.f32.mxu0 0.0
    %123 = vmatmul.mubr.f32.gmra.mxu0 %v41
    %v124 = vpop.f32.mrf.mxu0
    %v125 = vadd.f32 0.0, %v124
    %v126 = vpop.f32.mrf.mxu0
    %127 = vdwg.mxu0
    %p128 = scmp.eq.s32.totalorder 0, 0
    // Predicated region
    $region22: #{tpu_custom_call.1} parent=1 // pred_check
      %p129 = pneg %p128
    $region23: #{tpu_custom_call.1} parent=1 // pred_check_branch
      %131 = sbr.rel (%p129) target = $region25
    $region24: #{tpu_custom_call.1} parent=1 // pred_region
      %132 = vst [vmem:[#allocation2] sm:$0xff] %v125
    $region25: #{tpu_custom_call.1} parent=1 // pred_fallthru
      _
    %p133 = scmp.gt.s32.totalorder 0, 0
    // Predicated region
    $region26: #{tpu_custom_call.1} parent=1 // pred_check
      %p134 = pneg %p133
    $region27: #{tpu_custom_call.1} parent=1 // pred_check_branch
      %136 = sbr.rel (%p134) target = $region29
    $region28: #{tpu_custom_call.1} parent=1 // pred_region
      %v137 = vld [vmem:[#allocation2] sm:$0xff]
      %v138 = vadd.f32 %v137, %v125
      %139 = vst [vmem:[#allocation2] sm:$0xff] %v138
    $region29: #{tpu_custom_call.1} parent=1 // pred_fallthru
      _
    // Predicated region
    $region30: #{tpu_custom_call.1} parent=1 // pred_check
      %p140 = pneg %p128
    $region31: #{tpu_custom_call.1} parent=1 // pred_check_branch
      %142 = sbr.rel (%p140) target = $region33
    $region32: #{tpu_custom_call.1} parent=1 // pred_region
      %v143 = vld [vmem:[#allocation2] sm:$0xff]
      %v144 = vld [vmem:[%s2] sm:$0x1]
      %v146 = vlaneseq
      %v147 = vshrl.u32 %v146, 7
      %v148 = vsub.s32 0, %v147
      %v149 = vrot.slane %v144, %v148
      %v151 = vadd.f32 %v143, %v149
      %152 = vst [vmem:[#allocation8] sm:$0xff] %v151
    $region33: #{tpu_custom_call.1} parent=1 // pred_fallthru
      _
    // Predicated region
    $region34: #{tpu_custom_call.1} parent=1 // pred_check
      _
    $region35: #{tpu_custom_call.1} parent=1 // pred_check_branch
      %154 = sbr.rel (0) target = $region37
    $region36: #{tpu_custom_call.1} parent=1 // pred_region
      %s156 = ssub.s32 128, 128
      %157 = vsyncadd [#allocation5], %s156
      %s159 = sshll.u32 [#allocation8], 4
      %s160 = int_to_ptr.vmem [resolvable:$true] %s159
      %162 = dma.vmem_to_hbm [thread:$0]  %s160, 128, %s3, [#allocation5]
    $region37: #{tpu_custom_call.1} parent=1 // pred_fallthru
      _
    // Predicated region
    $region38: #{tpu_custom_call.1} parent=1 // pred_check
      _
    $region39: #{tpu_custom_call.1} parent=1 // pred_check_branch
      %164 = sbr.rel (0) target = $region41
    $region40: #{tpu_custom_call.1} parent=1 // pred_region
      %165 = dma.done [#allocation5], 128
    $region41: #{tpu_custom_call.1} parent=1 // pred_fallthru
      _
    %166 = vsyncpa [#allocation4], 1
    %167 = vsyncpa [#allocation7], 1
    %168 = vsyncpa [#allocation5], 1

</llo_original>
